<compile_context>
chip_gen: v5e
topology: v5e:2x2
jax: 0.10.0
libtpu: 0.0.40
codegen_flags: <defaults>
</compile_context>

<pallas_src>
import jax
import jax.numpy as jnp
import numpy as np
from jax.experimental import pallas as pl
from jax.experimental.pallas import tpu as pltpu

BN_EPS = 1e-5
LANE = 128
# Matmul operand dtype. f32 keeps tight numerical parity with the PyTorch
# reference; flip to jnp.bfloat16 on v6e/v7x (MXU-native) -- BN statistics and
# the BN apply stay in f32 either way.
MATMUL_DTYPE = jnp.float32


def _pad_lanes(c):
    return ((c + LANE - 1) // LANE) * LANE


def _choose_groups_per_tile(bs, ns, target_rows):
    """Pooled groups per tile: each group (nsample rows) lives wholly inside a
    tile, the pooled-output block height is a multiple of 8 (or the full B*S),
    and tiles evenly divide the problem."""
    candidates = [g for g in range(1, bs + 1)
                  if bs % g == 0 and (g % 8 == 0 or g == bs)]
    fit = [g for g in candidates if g * ns <= target_rows]
    return max(fit) if fit else min(candidates)


# ---------------------------------------------------------------------------
# Pallas kernels
# ---------------------------------------------------------------------------
def _make_stats_kernel(num_prev):
    """Per-tile: re-derive layers 0..num_prev-1 (already-finalized scale/shift),
    compute layer `num_prev` pre-activation, accumulate per-channel sum and
    sum-of-squares into resident [1, Cpad] outputs across the grid."""
    def kernel(x_ref, *args):
        n = num_prev
        w_refs = args[:n + 1]
        scale_refs = args[n + 1: 2 * n + 1]
        shift_refs = args[2 * n + 1: 3 * n + 1]
        sum_ref, sumsq_ref = args[3 * n + 1], args[3 * n + 2]

        @pl.when(pl.program_id(0) == 0)
        def _init():
            sum_ref[...] = jnp.zeros_like(sum_ref)
            sumsq_ref[...] = jnp.zeros_like(sumsq_ref)

        h = x_ref[...].astype(jnp.float32)
        for i in range(n):
            y = jnp.dot(h.astype(MATMUL_DTYPE), w_refs[i][...].astype(MATMUL_DTYPE),
                        preferred_element_type=jnp.float32)
            h = jnp.maximum(y * scale_refs[i][...] + shift_refs[i][...], 0.0)
        y = jnp.dot(h.astype(MATMUL_DTYPE), w_refs[n][...].astype(MATMUL_DTYPE),
                    preferred_element_type=jnp.float32)
        sum_ref[...] += jnp.sum(y, axis=0, keepdims=True)
        sumsq_ref[...] += jnp.sum(y * y, axis=0, keepdims=True)

    return kernel


def _make_apply_pool_kernel(num_layers, nsample):
    """Per-tile: full MLP chain with folded BN+ReLU, then max over nsample
    in-tile; writes only the pooled, lane-dense [groups, Cpad] block."""
    def kernel(x_ref, *args):
        L = num_layers
        w_refs = args[:L]
        scale_refs = args[L:2 * L]
        shift_refs = args[2 * L:3 * L]
        out_ref = args[3 * L]

        h = x_ref[...].astype(jnp.float32)
        for i in range(L):
            y = jnp.dot(h.astype(MATMUL_DTYPE), w_refs[i][...].astype(MATMUL_DTYPE),
                        preferred_element_type=jnp.float32)
            h = jnp.maximum(y * scale_refs[i][...] + shift_refs[i][...], 0.0)
        tm, cpad = h.shape
        out_ref[...] = jnp.max(h.reshape(tm // nsample, nsample, cpad), axis=1)

    return kernel


def _const_spec(arr):
    nd = arr.ndim
    return pl.BlockSpec(arr.shape, lambda i, _nd=nd: (0,) * _nd)


def _stats_pass(x, w_list, scale_list, shift_list, tile_m):
    M, cin = x.shape
    cpad = w_list[-1].shape[1]
    n_prev = len(scale_list)
    in_specs = ([pl.BlockSpec((tile_m, cin), lambda i: (i, 0))]
                + [_const_spec(w) for w in w_list]
                + [_const_spec(s) for s in scale_list]
                + [_const_spec(s) for s in shift_list])
    out_spec = pl.BlockSpec((1, cpad), lambda i: (0, 0))   # resident accumulator
    return pl.pallas_call(
        _make_stats_kernel(n_prev),
        grid=(M // tile_m,),
        in_specs=in_specs,
        out_specs=[out_spec, out_spec],
        out_shape=[jax.ShapeDtypeStruct((1, cpad), jnp.float32),
                   jax.ShapeDtypeStruct((1, cpad), jnp.float32)],
        compiler_params=pltpu.CompilerParams(
            dimension_semantics=("arbitrary",)),          # cross-tile reduction
    )(x, *w_list, *scale_list, *shift_list)


def _apply_pool_pass(x, w_list, scale_list, shift_list, nsample, groups_per_tile):
    M, cin = x.shape
    cpad = w_list[-1].shape[1]
    bs = M // nsample
    tile_m = groups_per_tile * nsample
    L = len(w_list)
    in_specs = ([pl.BlockSpec((tile_m, cin), lambda i: (i, 0))]
                + [_const_spec(w) for w in w_list]
                + [_const_spec(s) for s in scale_list]
                + [_const_spec(s) for s in shift_list])
    out_spec = pl.BlockSpec((groups_per_tile, cpad), lambda i: (i, 0))
    return pl.pallas_call(
        _make_apply_pool_kernel(L, nsample),
        grid=(bs // groups_per_tile,),
        in_specs=in_specs,
        out_specs=out_spec,
        out_shape=jax.ShapeDtypeStruct((bs, cpad), jnp.float32),
        compiler_params=pltpu.CompilerParams(
            dimension_semantics=("parallel",)),           # rows independent (megacore on v7x)
    )(x, *w_list, *scale_list, *shift_list)


def fused_mlp_maxpool(x, params, nsample, *, tile_rows=512):
    """x: [M, Cin] flattened grouped features.  params: list of
    (w [Cin_l, Cout_l], bias, gamma [1, Cout_l], beta [1, Cout_l]).
    Returns pooled [M // nsample, Cout_last] features."""
    M, cin = x.shape
    bs = M // nsample
    gpt = _choose_groups_per_tile(bs, nsample, tile_rows)
    tile_m = gpt * nsample

    # Pad every layer's channels to lane-dense 128 multiples; drop the conv
    # bias (cancelled exactly by BN mean subtraction).
    w_pad, gamma_pad, beta_pad, couts = [], [], [], []
    last_pad = cin
    for (w, _bias, gamma, beta) in params:
        cin_l, cout_l = w.shape
        cpad = _pad_lanes(cout_l)
        w_pad.append(jnp.zeros((last_pad, cpad), jnp.float32)
                     .at[:cin_l, :cout_l].set(w.astype(jnp.float32)))
        gamma_pad.append(jnp.zeros((1, cpad), jnp.float32)
                         .at[:, :cout_l].set(gamma.reshape(1, -1)))
        beta_pad.append(jnp.zeros((1, cpad), jnp.float32)
                        .at[:, :cout_l].set(beta.reshape(1, -1)))
        couts.append(cout_l)
        last_pad = cpad

    # Per-layer batch statistics (training-mode BN) accumulated tile-by-tile,
    # then folded into (scale, shift) for the fused apply pass.
    scales, shifts = [], []
    for l in range(len(params)):
        s, ss = _stats_pass(x, w_pad[:l + 1], scales, shifts, tile_m)
        mean = s / M
        var = jnp.maximum(ss / M - mean * mean, 0.0)
        scale = gamma_pad[l] * jax.lax.rsqrt(var + BN_EPS)
        shift = beta_pad[l] - mean * scale
        scales.append(scale)
        shifts.append(shift)

    pooled = _apply_pool_pass(x, w_pad, scales, shifts, nsample, gpt)
    return pooled[:, :couts[-1]]


# ---------------------------------------------------------------------------
# Grouping glue (plain JAX): square_distance / query_ball_point / index_points
# ---------------------------------------------------------------------------
def square_distance(src, dst):
    dist = -2.0 * jnp.einsum("bnc,bmc->bnm", src, dst)
    dist = dist + jnp.sum(src ** 2, -1)[:, :, None]
    dist = dist + jnp.sum(dst ** 2, -1)[:, None, :]
    return dist


def index_points(points, idx):
    B, N, C = points.shape
    _, S, ns = idx.shape
    idx_flat = idx.reshape(B, S * ns)
    idx_exp = jnp.broadcast_to(idx_flat[:, :, None], (B, S * ns, C))
    gathered = jnp.take_along_axis(points, idx_exp, axis=1)
    return gathered.reshape(B, S, ns, C)


def query_ball_point(radius, nsample, xyz, new_xyz):
    # TODO(synk): ball-query sort + the grouped-point gather stay in XLA glue;
    # a Pallas scalar-prefetch DMA gather would avoid materializing [B,S,ns,C].
    B, N, _ = xyz.shape
    S = new_xyz.shape[1]
    sqrdists = square_distance(new_xyz, xyz)                    # [B, S, N]
    group_idx = jnp.broadcast_to(jnp.arange(N, dtype=jnp.int32), (B, S, N))
    group_idx = jnp.where(sqrdists > radius ** 2, N, group_idx)
    group_idx = jnp.sort(group_idx, axis=-1)[:, :, :nsample]    # [B, S, nsample]
    group_first = group_idx[:, :, 0:1]
    group_idx = jnp.where(group_idx == N, group_first, group_idx)
    return group_idx


# ---------------------------------------------------------------------------
# PointNetSetAbstraction forward
# ---------------------------------------------------------------------------
def pointnet_sa_forward(xyz, points, params, *, npoint, radius, nsample,
                        group_all, tile_rows=512):
    """
    xyz:    [B, 3, N]   (PyTorch channel-first)
    points: [B, D, N] or None
    params: list of (w [Cin, Cout], bias [1, Cout], gamma [1, Cout], beta [1, Cout])
    returns new_xyz [B, 3, S], new_points [B, C_last, S]
    """
    B = xyz.shape[0]
    xyz_t = jnp.transpose(xyz, (0, 2, 1))                       # [B, N, 3]
    points_t = jnp.transpose(points, (0, 2, 1)) if points is not None else None

    if group_all:
        N = xyz_t.shape[1]
        new_xyz = jnp.zeros((B, 1, 3), jnp.float32)
        grouped = xyz_t[:, None, :, :]                          # [B, 1, N, 3]
        if points_t is not None:
            grouped = jnp.concatenate([grouped, points_t[:, None, :, :]], axis=-1)
        new_points = grouped
        S, ns = 1, N
    else:
        N = xyz_t.shape[1]
        S, ns = N, nsample                                      # new_xyz = xyz (no FPS in this module)
        idx = query_ball_point(radius, nsample, xyz_t, xyz_t)   # [B, S, ns]
        grouped_xyz = index_points(xyz_t, idx)                  # [B, S, ns, 3]
        grouped_xyz_norm = grouped_xyz - xyz_t[:, :, None, :]
        if points_t is not None:
            grouped_points = index_points(points_t, idx)        # [B, S, ns, D]
            new_points = jnp.concatenate([grouped_xyz_norm, grouped_points], axis=-1)
        else:
            new_points = grouped_xyz_norm
        new_xyz = xyz_t

    C_in = new_points.shape[-1]
    x = new_points.reshape(B * S * ns, C_in).astype(jnp.float32)

    feat = fused_mlp_maxpool(x, params, ns, tile_rows=tile_rows)  # [B*S, C_out]
    C_out = feat.shape[-1]
    new_points_out = jnp.transpose(feat.reshape(B, S, C_out), (0, 2, 1))  # [B, C_out, S]
    new_xyz_out = jnp.transpose(new_xyz, (0, 2, 1))             # [B, 3, S]
    return new_xyz_out, new_points_out


# Pure-JAX reference of the hot path (full PyTorch math incl. bias; the bias is
# algebraically cancelled by the BN mean subtraction).
def _ref_mlp_stack(x, params):
    for (w, b, gamma, beta) in params:
        y = x @ w + b
        mean = jnp.mean(y, axis=0, keepdims=True)
        var = jnp.mean(jnp.square(y - mean), axis=0, keepdims=True)
        x = jnp.maximum((y - mean) * jax.lax.rsqrt(var + BN_EPS) * gamma + beta, 0.0)
    return x


if __name__ == "__main__":
    # Module config: PointNetSetAbstraction(npoint=16, radius=0.4, nsample=8,
    #                                       in_channel=3+4, mlp=[16, 32], group_all=False)
    B, N, D = 2, 16, 4
    npoint, radius, nsample = N, 0.4, 8
    in_channel = 3 + D
    mlp = [16, 32]
    group_all = False

    key = jax.random.PRNGKey(0)
    k_xyz, k_pts, *k_params = jax.random.split(key, 2 + 4 * len(mlp))

    xyz = jax.random.uniform(k_xyz, (B, 3, N), jnp.float32)          # [B, 3, N]
    points = jax.random.normal(k_pts, (B, D, N), jnp.float32)        # [B, D, N]

    # Deterministic parameter init (Conv2d 1x1 weight stored transposed [Cin, Cout]).
    params = []
    last = in_channel
    for i, cout in enumerate(mlp):
        kw, kb, kg, kbe = k_params[4 * i: 4 * i + 4]
        bound = 1.0 / np.sqrt(last)
        w = jax.random.uniform(kw, (last, cout), jnp.float32, -bound, bound)
        b = jax.random.uniform(kb, (1, cout), jnp.float32, -bound, bound)
        gamma = 1.0 + 0.1 * jax.random.normal(kg, (1, cout), jnp.float32)
        beta = 0.1 * jax.random.normal(kbe, (1, cout), jnp.float32)
        params.append((w, b, gamma, beta))
        last = cout

    # tile_rows=64 -> 4 grid steps at this toy size, exercising the tiled
    # stats-accumulation and pipelined apply passes (default 512 at scale).
    new_xyz, new_feat = pointnet_sa_forward(
        xyz, points, params,
        npoint=npoint, radius=radius, nsample=nsample, group_all=group_all,
        tile_rows=64)
    jax.block_until_ready((new_xyz, new_feat))

    assert new_xyz.shape == (B, 3, N)
    assert new_feat.shape == (B, mlp[-1], N)

    # Sanity check of the fused Pallas hot path against pure JAX.
    xyz_t = jnp.transpose(xyz, (0, 2, 1))
    pts_t = jnp.transpose(points, (0, 2, 1))
    idx = query_ball_point(radius, nsample, xyz_t, xyz_t)
    gx = index_points(xyz_t, idx) - xyz_t[:, :, None, :]
    gp = index_points(pts_t, idx)
    np_in = jnp.concatenate([gx, gp], axis=-1).reshape(B * N * nsample, in_channel)
    ref = _ref_mlp_stack(np_in, params).reshape(B * N, nsample, mlp[-1]).max(axis=1)
    ref = jnp.transpose(ref.reshape(B, N, mlp[-1]), (0, 2, 1))
    np.testing.assert_allclose(np.asarray(new_feat), np.asarray(ref), rtol=1e-2, atol=1e-2)

    print("KERNEL_OK")
</pallas_src>

<mosaic_0001>
module attributes {stable_mosaic.version = 11 : i64} {
  func.func @kernel(%arg0: i32, %arg1: memref<64x7xf32, #tpu.memory_space<vmem>>, %arg2: memref<7x128xf32, #tpu.memory_space<vmem>>, %arg3: memref<1x128xf32, #tpu.memory_space<vmem>>, %arg4: memref<1x128xf32, #tpu.memory_space<vmem>>) attributes {dimension_semantics = [#tpu.dimension_semantics<arbitrary>], iteration_bounds = array<i64: 4>, scalar_prefetch = 0 : i64, scratch_operands = 0 : i64, tpu.core_type = #tpu.core_type<tc>, window_params = [{transform_indices = @transform_0, window_bounds = array<i64: 64, 7>}, {pipeline_mode = #tpu.pipeline_mode<synchronous>, transform_indices = @transform_1, window_bounds = array<i64: 7, 128>}, {pipeline_mode = #tpu.pipeline_mode<synchronous>, transform_indices = @transform_2, window_bounds = array<i64: 1, 128>}, {pipeline_mode = #tpu.pipeline_mode<synchronous>, transform_indices = @transform_3, window_bounds = array<i64: 1, 128>}]} {
    %c0_i32 = arith.constant 0 : i32
    %0 = arith.cmpi eq, %arg0, %c0_i32 : i32
    %1 = arith.extui %0 : i1 to i32
    %c0_i32_0 = arith.constant 0 : i32
    %2 = arith.cmpi ne, %1, %c0_i32_0 : i32
    scf.if %2 {
      %cst_14 = arith.constant 0.000000e+00 : f32
      %17 = vector.broadcast %cst_14 : f32 to vector<1x128xf32>
      %c0_15 = arith.constant 0 : index
      %c0_16 = arith.constant 0 : index
      %18 = vector.load %arg3[%c0_15, %c0_16] : memref<1x128xf32, #tpu.memory_space<vmem>>, vector<1x128xf32>
      tpu.vector_store %arg3[%c0_15, %c0_16], %17 {strides = array<i32>} : memref<1x128xf32, #tpu.memory_space<vmem>>, vector<1x128xf32>,
      %cst_17 = arith.constant 0.000000e+00 : f32
      %19 = vector.broadcast %cst_17 : f32 to vector<1x128xf32>
      %c0_18 = arith.constant 0 : index
      %c0_19 = arith.constant 0 : index
      %20 = vector.load %arg4[%c0_18, %c0_19] : memref<1x128xf32, #tpu.memory_space<vmem>>, vector<1x128xf32>
      tpu.vector_store %arg4[%c0_18, %c0_19], %19 {strides = array<i32>} : memref<1x128xf32, #tpu.memory_space<vmem>>, vector<1x128xf32>,
    } else {
    }
    %c0 = arith.constant 0 : index
    %c0_1 = arith.constant 0 : index
    %3 = vector.load %arg1[%c0, %c0_1] : memref<64x7xf32, #tpu.memory_space<vmem>>, vector<64x7xf32>
    %c0_2 = arith.constant 0 : index
    %c0_3 = arith.constant 0 : index
    %4 = vector.load %arg2[%c0_2, %c0_3] : memref<7x128xf32, #tpu.memory_space<vmem>>, vector<7x128xf32>
    %cst = arith.constant dense<0.000000e+00> : vector<64x128xf32>
    %5 = tpu.matmul %3, %4, %cst {dimension_numbers = #tpu.dot_dimension_numbers<[1], [0], [0], [1], [0, 0, 1, 1], [], []>} : vector<64x7xf32>, vector<7x128xf32>, vector<64x128xf32> -> vector<64x128xf32>
    %c0_4 = arith.constant 0 : index
    %c0_5 = arith.constant 0 : index
    %6 = vector.load %arg3[%c0_4, %c0_5] : memref<1x128xf32, #tpu.memory_space<vmem>>, vector<1x128xf32>
    %cst_6 = arith.constant dense<0.000000e+00> : vector<128xf32>
    %7 = vector.multi_reduction <add>, %5, %cst_6 [0] : vector<64x128xf32> to vector<128xf32>
    %8 = vector.shape_cast %7 : vector<128xf32> to vector<1x128xf32>
    %9 = arith.addf %6, %8 : vector<1x128xf32>
    %c0_7 = arith.constant 0 : index
    %c0_8 = arith.constant 0 : index
    %10 = vector.load %arg3[%c0_7, %c0_8] : memref<1x128xf32, #tpu.memory_space<vmem>>, vector<1x128xf32>
    tpu.vector_store %arg3[%c0_7, %c0_8], %9 {strides = array<i32>} : memref<1x128xf32, #tpu.memory_space<vmem>>, vector<1x128xf32>,
    %c0_9 = arith.constant 0 : index
    %c0_10 = arith.constant 0 : index
    %11 = vector.load %arg4[%c0_9, %c0_10] : memref<1x128xf32, #tpu.memory_space<vmem>>, vector<1x128xf32>
    %12 = arith.mulf %5, %5 : vector<64x128xf32>
    %cst_11 = arith.constant dense<0.000000e+00> : vector<128xf32>
    %13 = vector.multi_reduction <add>, %12, %cst_11 [0] : vector<64x128xf32> to vector<128xf32>
    %14 = vector.shape_cast %13 : vector<128xf32> to vector<1x128xf32>
    %15 = arith.addf %11, %14 : vector<1x128xf32>
    %c0_12 = arith.constant 0 : index
    %c0_13 = arith.constant 0 : index
    %16 = vector.load %arg4[%c0_12, %c0_13] : memref<1x128xf32, #tpu.memory_space<vmem>>, vector<1x128xf32>
    tpu.vector_store %arg4[%c0_12, %c0_13], %15 {strides = array<i32>} : memref<1x128xf32, #tpu.memory_space<vmem>>, vector<1x128xf32>,
    return
  }
  func.func @transform_0(%arg0: i32) -> (i32, i32) {
    %c0_i32 = arith.constant 0 : i32
    %c0_i32_0 = arith.constant 0 : i32
    return %arg0, %c0_i32 : i32, i32
  }
  func.func @transform_1(%arg0: i32) -> (i32, i32) {
    %c0_i32 = arith.constant 0 : i32
    %c0_i32_0 = arith.constant 0 : i32
    %c0_i32_1 = arith.constant 0 : i32
    return %c0_i32, %c0_i32_0 : i32, i32
  }
  func.func @transform_2(%arg0: i32) -> (i32, i32) {
    %c0_i32 = arith.constant 0 : i32
    %c0_i32_0 = arith.constant 0 : i32
    %c0_i32_1 = arith.constant 0 : i32
    return %c0_i32, %c0_i32_0 : i32, i32
  }
  func.func @transform_3(%arg0: i32) -> (i32, i32) {
    %c0_i32 = arith.constant 0 : i32
    %c0_i32_0 = arith.constant 0 : i32
    %c0_i32_1 = arith.constant 0 : i32
    return %c0_i32, %c0_i32_0 : i32, i32
  }
}

</mosaic_0001>

<llo_original>
// kernel: tpu_custom_call.1
$region0: #{tpu_custom_call.1}
  #allocation0 [shape = 'u32[]', space=smem, size = 0x4, offset = 0x4, fixed_abs, tag = 'smem constant byte address 0x4 - core index']
  #allocation1 [shape = 'u32[72,128]{1,0:T(1,128)}', space=vmem, size = 0x9000, scoped, tag = 'internal scratch']
  %s0 = inlined_call_operand.vmem [shape: f32[256,7], index: 0, kind: input, shape index: {}]
  %s1 = inlined_call_operand.vmem [shape: f32[7,128], index: 1, kind: input, shape index: {}]
  %s2 = inlined_call_operand.hbm [shape: f32[1,128], index: 2, kind: output, shape index: {0}]
  %s3 = inlined_call_operand.hbm [shape: f32[1,128], index: 3, kind: output, shape index: {1}]
  %4 = xla_tuple %s2, %s3
  %s5 = sld [smem:[#allocation0]]
  $region53: #{tpu_custom_call.1} parent=0
    _
  %s7 = ssub.s32 1, %s5
  %s8 = scalar_select 0, %s7, %s5
  $region1: #{tpu_custom_call.1} parent=0
    #allocation2 [shape = 'u8[512]{0}', space=vmem, size = 0x400, scoped, tag = 'output window, operand 0, single buffered']
    #allocation3 [shape = 's32[2]{0}', space=sflag, size = 0x8, scoped, tag = 'scoped memory for tpu_custom_call.1']
    #allocation4 [shape = 'u8[512]{0}', space=vmem, size = 0x400, scoped, tag = 'output window, operand 1, single buffered']
    #allocation5 [shape = 's32[1]{0}', space=sflag, size = 0x4, scoped, tag = 'scoped memory for tpu_custom_call.1']
    %9 = vsyncpa [#allocation3], 0
    %10 = vsyncpa [#allocation5], 0
    loop: start=0, step=1, limit=6
    $region2: #{tpu_custom_call.1} parent=1 // loop_pre_header
      _
    $region3: #{tpu_custom_call.1} parent=1 // loop_header
      %s12 = sphi 0, %s16
      %p13 = scmp.ge.s32.totalorder %s12, 6
      %s22 = sphi 0, %s24
      %s25 = sphi 0, %s22
      %s26 = sphi 0, %s25
      %s42 = sphi 0, %s26
      %s46 = sphi 0, %s46
      %s48 = sphi 0, %s46
      %s49 = sphi 0, %s48
      %s63 = sphi 0, %s49
      %s67 = sphi 0, %s67
      %s69 = sphi 0, %s67
      %s70 = sphi 0, %s69
      %s84 = sphi 0, %s70
      %s88 = sphi 0, %s88
      %s90 = sphi 0, %s88
      %s91 = sphi 0, %s90
      %s105 = sphi 0, %s91
    $region4: #{tpu_custom_call.1} parent=1 // loop_header_branch
      %15 = sbr.rel (%p13) target = $region8
    $region5: #{tpu_custom_call.1} parent=1 // loop_body
      %s17 = ssub.s32 %s12, 1
      %s18 = ssub.s32 %s12, 2
      %s19 = sadd.s32 %s12, 1
      %s20 = ssub.s32 %s12, %s19
      %p21 = scmp.eq.s32.totalorder %s20, 0
      %s23 = sadd.s32 %s22, 1
      %s24 = scalar_select %p21, %s22, %s23
      %p27 = pneg %p21
      %p28 = scmp.eq.s32.totalorder %s12, 3
      %p29 = por %p27, %p28
      %p30 = scmp.ne.s32.totalorder %s22, %s25
      %p31 = scmp.eq.s32.totalorder %s12, 0
      %p32 = por %p30, %p31
      %p33 = scmp.ne.s32.totalorder %s22, %s25
      %p34 = scmp.eq.s32.totalorder %s17, 3
      %p35 = por %p33, %p34
      %p36 = scmp.ne.s32.totalorder %s25, %s26
      %p37 = scmp.eq.s32.totalorder %s17, 0
      %p38 = por %p36, %p37
      %p39 = scmp.ne.s32.totalorder %s25, %s26
      %p40 = scmp.eq.s32.totalorder %s18, 3
      %p41 = por %p39, %p40
      %p43 = scmp.ne.s32.totalorder %s26, %s42
      %p44 = scmp.eq.s32.totalorder %s18, 0
      %p45 = por %p43, %p44
      %s47 = sadd.s32 %s46, 1
      %p50 = scmp.eq.s32.totalorder %s12, 3
      %p51 = scmp.ne.s32.totalorder %s46, %s48
      %p52 = scmp.eq.s32.totalorder %s12, 0
      %p53 = por %p51, %p52
      %p54 = scmp.ne.s32.totalorder %s46, %s48
      %p55 = scmp.eq.s32.totalorder %s17, 3
      %p56 = por %p54, %p55
      %p57 = scmp.ne.s32.totalorder %s48, %s49
      %p58 = scmp.eq.s32.totalorder %s17, 0
      %p59 = por %p57, %p58
      %p60 = scmp.ne.s32.totalorder %s48, %s49
      %p61 = scmp.eq.s32.totalorder %s18, 3
      %p62 = por %p60, %p61
      %p64 = scmp.ne.s32.totalorder %s49, %s63
      %p65 = scmp.eq.s32.totalorder %s18, 0
      %p66 = por %p64, %p65
      %s68 = sadd.s32 %s67, 1
      %p71 = scmp.eq.s32.totalorder %s12, 3
      %p72 = scmp.ne.s32.totalorder %s67, %s69
      %p73 = scmp.eq.s32.totalorder %s12, 0
      %p74 = por %p72, %p73
      %p75 = scmp.ne.s32.totalorder %s67, %s69
      %p76 = scmp.eq.s32.totalorder %s17, 3
      %p77 = por %p75, %p76
      %p78 = scmp.ne.s32.totalorder %s69, %s70
      %p79 = scmp.eq.s32.totalorder %s17, 0
      %p80 = por %p78, %p79
      %p81 = scmp.ne.s32.totalorder %s69, %s70
      %p82 = scmp.eq.s32.totalorder %s18, 3
      %p83 = por %p81, %p82
      %p85 = scmp.ne.s32.totalorder %s70, %s84
      %p86 = scmp.eq.s32.totalorder %s18, 0
      %p87 = por %p85, %p86
      %s89 = sadd.s32 %s88, 1
      %p92 = scmp.eq.s32.totalorder %s12, 3
      %p93 = scmp.ne.s32.totalorder %s88, %s90
      %p94 = scmp.eq.s32.totalorder %s12, 0
      %p95 = por %p93, %p94
      %p96 = scmp.ne.s32.totalorder %s88, %s90
      %p97 = scmp.eq.s32.totalorder %s17, 3
      %p98 = por %p96, %p97
      %p99 = scmp.ne.s32.totalorder %s90, %s91
      %p100 = scmp.eq.s32.totalorder %s17, 0
      %p101 = por %p99, %p100
      %p102 = scmp.ne.s32.totalorder %s90, %s91
      %p103 = scmp.eq.s32.totalorder %s18, 3
      %p104 = por %p102, %p103
      %p106 = scmp.ne.s32.totalorder %s91, %s105
      %p107 = scmp.eq.s32.totalorder %s18, 0
      %p108 = por %p106, %p107
      %p109 = scmp.le.s32.totalorder 1, %s12
      %p110 = scmp.lt.s32.totalorder %s12, 5
      %p111 = pnand %p109, %p110
      %p112 = pneg %p111
      // Predicated region
      $region9: #{tpu_custom_call.1} parent=5 // pred_check
        _
      $region10: #{tpu_custom_call.1} parent=5 // pred_check_branch
        %114 = sbr.rel (%p111) target = $region12
      $region11: #{tpu_custom_call.1} parent=5 // pred_region
        %s115 = ssub.s32 %s12, 1
        // Predicated region
        $region13: #{tpu_custom_call.1} parent=11 // pred_check
          %p116 = pneg %p59
        $region14: #{tpu_custom_call.1} parent=11 // pred_check_branch
          %118 = sbr.rel (%p116) target = $region16
        $region15: #{tpu_custom_call.1} parent=11 // pred_region
          _
        $region16: #{tpu_custom_call.1} parent=11 // pred_fallthru
          _
      $region12: #{tpu_custom_call.1} parent=5 // pred_fallthru
        _
      %p119 = scmp.lt.s32.totalorder %s12, 4
      // Predicated region
      $region17: #{tpu_custom_call.1} parent=5 // pred_check
        %p120 = pneg %p119
      $region18: #{tpu_custom_call.1} parent=5 // pred_check_branch
        %122 = sbr.rel (%p120) target = $region20
      $region19: #{tpu_custom_call.1} parent=5 // pred_region
        // Predicated region
        $region21: #{tpu_custom_call.1} parent=19 // pred_check
          %p123 = pneg %p32
        $region22: #{tpu_custom_call.1} parent=19 // pred_check_branch
          %125 = sbr.rel (%p123) target = $region24
        $region23: #{tpu_custom_call.1} parent=19 // pred_region
          %s126 = smul.u32 8, %s12
          %p127 = scmp.lt.s32.totalorder %s126, 31
          %s128 = scalar_select %p127, %s126, 31
          %s129 = smul.addr %s128, 8
          %s130 = scalar_lea.vmem %s0, %s129
          %s131 = smul.u32 8, %s12
        $region24: #{tpu_custom_call.1} parent=19 // pred_fallthru
          _
      $region20: #{tpu_custom_call.1} parent=5 // pred_fallthru
        _
      %p132 = scmp.le.s32.totalorder 1, %s12
      %p133 = scmp.lt.s32.totalorder %s12, 5
      %p134 = pnand %p132, %p133
      %p135 = pneg %p134
      // Predicated region
      $region25: #{tpu_custom_call.1} parent=5 // pred_check
        _
      $region26: #{tpu_custom_call.1} parent=5 // pred_check_branch
        %137 = sbr.rel (%p134) target = $region28
      $region27: #{tpu_custom_call.1} parent=5 // pred_region
        %s138 = ssub.s32 %s12, 1
        %s139 = smul.u32 8, %s17
        %p140 = scmp.lt.s32.totalorder %s139, 31
        %s141 = scalar_select %p140, %s139, 31
        %s142 = smul.addr %s141, 8
        %s143 = scalar_lea.vmem %s0, %s142
        %p144 = pneg %p38
        %p145 = pneg %p35
        %p146 = pneg %p59
        %p147 = pneg %p56
        %p148 = pneg %p80
        %p149 = pneg %p77
        %p150 = pneg %p101
        %p151 = pneg %p98
        %s152 = smul.u32 8, %s17
        %p153 = scmp.lt.s32.totalorder %s152, 31
        %s154 = scalar_select %p153, %s152, 31
        %s155 = smul.addr %s154, 8
        %s156 = scalar_lea.vmem %s0, %s155
        %s157 = smul.u32 8, %s17
        %p158 = scmp.eq.s32.totalorder %s17, 0
        // Predicated region
        $region29: #{tpu_custom_call.1} parent=27 // pred_check
          %p159 = pneg %p158
        $region30: #{tpu_custom_call.1} parent=27 // pred_check_branch
          %161 = sbr.rel (%p159) target = $region32
        $region31: #{tpu_custom_call.1} parent=27 // pred_region
          %162 = vst [vmem:[#allocation2] sm:$0x1] 0.0
          %163 = vst [vmem:[#allocation4] sm:$0x1] 0.0
        $region32: #{tpu_custom_call.1} parent=27 // pred_fallthru
          _
        %v164 = vld [vmem:[%s156] sm:$0xff]
        %v165 = vld [vmem:[%s156 + $0x8] sm:$0xff]
        %v166 = vld [vmem:[%s156 + $0x10] sm:$0xff]
        %v167 = vld [vmem:[%s156 + $0x18] sm:$0xff]
        %v168 = vld [vmem:[%s156 + $0x20] sm:$0xff]
        %v169 = vld [vmem:[%s156 + $0x28] sm:$0xff]
        %v170 = vld [vmem:[%s156 + $0x30] sm:$0xff]
        %v171 = vld [vmem:[%s156 + $0x38] sm:$0xff]
        %v172 = vld [vmem:[%s1] sm:$0x7f]
        %vm173 = vcmask 56320
        %v175 = vsel %vm173, %v164, 0
        %v178 = vsel %vm173, %v165, 0
        %v181 = vsel %vm173, %v166, 0
        %v184 = vsel %vm173, %v167, 0
        %v187 = vsel %vm173, %v168, 0
        %v190 = vsel %vm173, %v169, 0
        %v193 = vsel %vm173, %v170, 0
        %v196 = vsel %vm173, %v171, 0
        %vm198 = vcmask 1046528
        %v200 = vsel %vm198, %v172, 0
        %202 = vmatpush.msra.mxu0 0.0
        %203 = vmatpush.msra.mxu0 0.0
        %204 = vmatpush.msra.mxu0 0.0
        %205 = vmatpush.msra.mxu0 0.0
        %206 = vmatpush.msra.mxu0 0.0
        %207 = vmatpush.msra.mxu0 0.0
        %208 = vmatpush.msra.mxu0 0.0
        %209 = vmatpush.msra.mxu0 0.0
        %210 = vmatpush.msra.mxu0 0.0
        %211 = vmatpush.msra.mxu0 0.0
        %212 = vmatpush.msra.mxu0 0.0
        %213 = vmatpush.msra.mxu0 0.0
        %214 = vmatpush.msra.mxu0 0.0
        %215 = vmatpush.msra.mxu0 0.0
        %216 = vmatpush.msra.mxu0 0.0
        %217 = vmatpush.msra.mxu0 %v200
        %218 = vmatmul.f32.gmra.mxu0 %v175
        %v219 = vpop.f32.mrf.mxu0
        %v220 = vadd.f32 0.0, %v219
        %221 = vmatmul.f32.gmra.mxu0 %v178
        %v222 = vpop.f32.mrf.mxu0
        %v223 = vadd.f32 0.0, %v222
        %224 = vmatmul.f32.gmra.mxu0 %v181
        %v225 = vpop.f32.mrf.mxu0
        %v226 = vadd.f32 0.0, %v225
        %227 = vmatmul.f32.gmra.mxu0 %v184
        %v228 = vpop.f32.mrf.mxu0
        %v229 = vadd.f32 0.0, %v228
        %230 = vmatmul.f32.gmra.mxu0 %v187
        %v231 = vpop.f32.mrf.mxu0
        %v232 = vadd.f32 0.0, %v231
        %233 = vmatmul.f32.gmra.mxu0 %v190
        %v234 = vpop.f32.mrf.mxu0
        %v235 = vadd.f32 0.0, %v234
        %236 = vmatmul.f32.gmra.mxu0 %v193
        %v237 = vpop.f32.mrf.mxu0
        %v238 = vadd.f32 0.0, %v237
        %239 = vmatmul.f32.gmra.mxu0 %v196
        %v240 = vpop.f32.mrf.mxu0
        %v241 = vadd.f32 0.0, %v240
        %242 = vdwg.mxu0
        %v243 = vld [vmem:[#allocation2] sm:$0x1]
        %v244 = vadd.f32 %v220, %v223
        %v245 = vadd.f32 %v244, %v226
        %v246 = vadd.f32 %v245, %v229
        %v247 = vadd.f32 %v246, %v232
        %v248 = vadd.f32 %v247, %v235
        %v249 = vadd.f32 %v248, %v238
        %v250 = vadd.f32 %v249, %v241
        %v251 = vrot.slane %v250, 4
        %v252 = vadd.f32 %v250, %v251
        %v253 = vrot.slane %v252, 2
        %v254 = vadd.f32 %v252, %v253
        %v255 = vrot.slane %v254, 1
        %v256 = vadd.f32 %v254, %v255
        %v257 = vadd.f32 %v243, %v256
        %258 = vst [vmem:[#allocation2] sm:$0x1] %v257
        %v259 = vld [vmem:[#allocation4] sm:$0x1]
        %v260 = vmul.f32 %v220, %v220
        %v261 = vmul.f32 %v223, %v223
        %v262 = vmul.f32 %v226, %v226
        %v263 = vmul.f32 %v229, %v229
        %v264 = vmul.f32 %v232, %v232
        %v265 = vmul.f32 %v235, %v235
        %v266 = vmul.f32 %v238, %v238
        %v267 = vmul.f32 %v241, %v241
        %v268 = vadd.f32 %v260, %v261
        %v269 = vadd.f32 %v268, %v262
        %v270 = vadd.f32 %v269, %v263
        %v271 = vadd.f32 %v270, %v264
        %v272 = vadd.f32 %v271, %v265
        %v273 = vadd.f32 %v272, %v266
        %v274 = vadd.f32 %v273, %v267
        %v275 = vrot.slane %v274, 4
        %v276 = vadd.f32 %v274, %v275
        %v277 = vrot.slane %v276, 2
        %v278 = vadd.f32 %v276, %v277
        %v279 = vrot.slane %v278, 1
        %v280 = vadd.f32 %v278, %v279
        %v281 = vadd.f32 %v259, %v280
        %282 = vst [vmem:[#allocation4] sm:$0x1] %v281
        // Predicated region
        $region33: #{tpu_custom_call.1} parent=27 // pred_check
          %p283 = pneg %p77
        $region34: #{tpu_custom_call.1} parent=27 // pred_check_branch
          %285 = sbr.rel (%p283) target = $region36
        $region35: #{tpu_custom_call.1} parent=27 // pred_region
          %287 = vsyncadd [#allocation3], 0
          %s289 = sshll.u32 [#allocation2], 4
          %s290 = int_to_ptr.vmem [resolvable:$true] %s289
          %s291 = sshll.u32 %s2, 4
          %s292 = int_to_ptr.hbm [resolvable:$true] %s291
          %294 = dma.vmem_to_hbm [thread:$0]  %s290, 16, %s292, [#allocation3]
        $region36: #{tpu_custom_call.1} parent=27 // pred_fallthru
          _
        // Predicated region
        $region37: #{tpu_custom_call.1} parent=27 // pred_check
          %p295 = pneg %p98
        $region38: #{tpu_custom_call.1} parent=27 // pred_check_branch
          %297 = sbr.rel (%p295) target = $region40
        $region39: #{tpu_custom_call.1} parent=27 // pred_region
          %299 = vsyncadd [#allocation5], 0
          %s301 = sshll.u32 [#allocation4], 4
          %s302 = int_to_ptr.vmem [resolvable:$true] %s301
          %s303 = sshll.u32 %s3, 4
          %s304 = int_to_ptr.hbm [resolvable:$true] %s303
          %306 = dma.vmem_to_hbm [thread:$0]  %s302, 16, %s304, [#allocation5]
        $region40: #{tpu_custom_call.1} parent=27 // pred_fallthru
          _
        // Predicated region
        $region41: #{tpu_custom_call.1} parent=27 // pred_check
          %p307 = pneg %p77
        $region42: #{tpu_custom_call.1} parent=27 // pred_check_branch
          %309 = sbr.rel (%p307) target = $region44
        $region43: #{tpu_custom_call.1} parent=27 // pred_region
          %311 = dma.done [#allocation3], 16
        $region44: #{tpu_custom_call.1} parent=27 // pred_fallthru
          _
        // Predicated region
        $region45: #{tpu_custom_call.1} parent=27 // pred_check
          %p312 = pneg %p98
        $region46: #{tpu_custom_call.1} parent=27 // pred_check_branch
          %314 = sbr.rel (%p312) target = $region48
        $region47: #{tpu_custom_call.1} parent=27 // pred_region
          %316 = dma.done [#allocation5], 16
        $region48: #{tpu_custom_call.1} parent=27 // pred_fallthru
          _
      $region28: #{tpu_custom_call.1} parent=5 // pred_fallthru
        _
      %p317 = scmp.le.s32.totalorder 2, %s12
      // Predicated region
      $region49: #{tpu_custom_call.1} parent=5 // pred_check
        %p318 = pneg %p317
      $region50: #{tpu_custom_call.1} parent=5 // pred_check_branch
        %320 = sbr.rel (%p318) target = $region52
      $region51: #{tpu_custom_call.1} parent=5 // pred_region
        %s321 = ssub.s32 %s12, 2
      $region52: #{tpu_custom_call.1} parent=5 // pred_fallthru
        _
    $region6: #{tpu_custom_call.1} parent=1 // loop_footer
      %s16 = sadd.s32 1, %s12
    $region7: #{tpu_custom_call.1} parent=1 // loop_footer_branch
      %11 = sbr.rel target = $region3
    $region8: #{tpu_custom_call.1} parent=1 // loop_exit
      _
    %322 = vsyncpa [#allocation3], 1
    %s323 = scalar_lea.sflag [#allocation3], 1
    %324 = vsyncpa %s323, 1
    %325 = vsyncpa [#allocation5], 1

</llo_original>
